<compile_context>
chip_gen: v7x
topology: tpu7x:2x2x1
jax: 0.10.0
libtpu: 0.0.40
codegen_flags: <defaults>
</compile_context>

<pallas_src>
import jax
import jax.numpy as jnp
from jax.experimental import pallas as pl
from jax.experimental.pallas import tpu as pltpu

_LANE = 128


def _head_kernel(hm_ref, w_ref, b_ref, probs_ref, pool_ref):
    # hm_ref   : [TB, HW, C]  feature-map tile, channels on the lane axis
    # w_ref    : [C, NPAD]    Linear weight, transposed & lane-padded, f32
    # b_ref    : [1, NPAD]    Linear bias, lane-padded, f32
    # probs_ref: [TB, NPAD]   sigmoid(Linear(pooled)), padded lanes sliced later
    # pool_ref : [TB, C]      MaxPool2d(7) result (flattened)
    hm = hm_ref[...]                                    # [TB, HW, C]
    pooled = jnp.max(hm, axis=1)                        # sublane/VPU reduce -> [TB, C]
    pool_ref[...] = pooled.astype(pool_ref.dtype)
    logits = jnp.dot(pooled.astype(jnp.float32), w_ref[...],
                     preferred_element_type=jnp.float32)   # [TB, NPAD] on MXU
    probs_ref[...] = jax.nn.sigmoid(logits + b_ref[...])   # EUP exp/recip


def _pick_tb(batch, tb_target, bytes_per_batch_row):
    """Batch tile size.

    * multiple of 8 (or == batch) so the out-block second-minor dims are legal
    * >= 2 grid steps whenever batch > 8 (v7x: shard across both TensorCores)
    * capped so double-buffered streaming blocks stay well under VMEM
    """
    vmem_cap = max(8, int((40 << 20) // (2 * bytes_per_batch_row)) // 8 * 8)
    if batch <= 8:
        return batch                       # single tiny tile; out-block dim == full batch
    tb = 8 * pl.cdiv(batch, 16)            # guarantees cdiv(batch, tb) >= 2
    tb = min(tb, max(8, (tb_target // 8) * 8), vmem_cap)
    return max(8, tb)


def globalnet_head(heatmap_bhwc, weight, bias, *, tb=32):
    """globalnet head on an NHWC backbone feature map.

    heatmap_bhwc: [B, H, W, C]  (f32 or bf16) backbone output
    weight      : [num_classes, C]  (PyTorch nn.Linear layout)
    bias        : [num_classes]
    Returns (probs [B, num_classes] f32, heatmap (pass-through), pool [B, C, 1, 1]).
    """
    B, H, W, C = heatmap_bhwc.shape
    HW = H * W
    num_classes = weight.shape[0]
    n_pad = pl.cdiv(num_classes, _LANE) * _LANE          # 14 -> 128 (lane-dense output)

    hm = heatmap_bhwc.reshape(B, HW, C)                   # free reshape (layout unchanged)

    # Lane-pad the tiny Linear params in the wrapper (negligible bytes), f32.
    w_t = jnp.zeros((C, n_pad), jnp.float32).at[:, :num_classes].set(
        weight.astype(jnp.float32).T)
    b2 = jnp.zeros((1, n_pad), jnp.float32).at[:, :num_classes].set(
        bias.astype(jnp.float32)[None, :])

    itemsize = hm.dtype.itemsize
    bytes_per_batch_row = HW * C * itemsize + C * itemsize + n_pad * 4
    TB = _pick_tb(B, tb, bytes_per_batch_row)
    grid = (pl.cdiv(B, TB),)                              # ragged last tile OK (masked)

    # VMEM estimate (double-buffered streaming blocks + params) -> scoped limit.
    usage = 2 * (TB * bytes_per_batch_row + (C + 1) * n_pad * 4)
    vmem_limit = int(min(max(2 * usage, 32 << 20), 110 << 20))

    probs_p, pooled = pl.pallas_call(
        _head_kernel,
        out_shape=(
            jax.ShapeDtypeStruct((B, n_pad), jnp.float32),
            jax.ShapeDtypeStruct((B, C), hm.dtype),
        ),
        grid=grid,
        in_specs=[
            pl.BlockSpec((TB, HW, C), lambda i: (i, 0, 0)),
            pl.BlockSpec((C, n_pad), lambda i: (0, 0)),    # grid-invariant: fetched once
            pl.BlockSpec((1, n_pad), lambda i: (0, 0)),
        ],
        out_specs=(
            pl.BlockSpec((TB, n_pad), lambda i: (i, 0)),
            pl.BlockSpec((TB, C), lambda i: (i, 0)),
        ),
        compiler_params=pltpu.CompilerParams(
            dimension_semantics=("parallel",),
            vmem_limit_bytes=vmem_limit,
        ),
    )(hm, w_t, b2)

    probs = probs_p[:, :num_classes]
    pool = pooled.reshape(B, C, 1, 1)                      # matches PyTorch pool.data shape
    return probs, heatmap_bhwc, pool                       # (x, heatmap.data, pool.data)


def globalnet_head_nchw(heatmap_nchw, weight, bias, *, tb=32):
    """PyTorch-layout entry point (NCHW).  The transpose is one extra HBM pass kept
    only for layout parity with the torch module; prefer globalnet_head (NHWC)."""
    hm_bhwc = jnp.transpose(heatmap_nchw, (0, 2, 3, 1))
    probs, _, pool = globalnet_head(hm_bhwc, weight, bias, tb=tb)
    return probs, heatmap_nchw, pool


def _reference(hm_bhwc, weight, bias):
    Bq, Hq, Wq, Cq = hm_bhwc.shape
    pooled = jnp.max(hm_bhwc.reshape(Bq, Hq * Wq, Cq), axis=1)
    logits = jnp.dot(pooled.astype(jnp.float32), weight.astype(jnp.float32).T,
                     precision=jax.lax.Precision.HIGHEST) + bias.astype(jnp.float32)
    return jax.nn.sigmoid(logits), pooled


if __name__ == "__main__":
    NUM_CLASSES = 14
    H, W = 7, 7
    key = jax.random.PRNGKey(0)
    k1, k2, k3, k4, k5, k6 = jax.random.split(key, 6)

    # ---- Case 1: small f32, single tile (B <= 8 -> TB = B), NHWC path ----
    B1, C1 = 4, 128
    hm1 = jax.random.normal(k1, (B1, H, W, C1), jnp.float32)
    w1 = jax.random.normal(k2, (NUM_CLASSES, C1), jnp.float32) * 0.05
    b1 = jax.random.normal(k3, (NUM_CLASSES,), jnp.float32) * 0.05

    probs1, hm_out1, pool1 = globalnet_head(hm1, w1, b1)
    jax.block_until_ready((probs1, hm_out1, pool1))

    probs_ref1, pooled_ref1 = _reference(hm1, w1, b1)
    assert probs1.shape == (B1, NUM_CLASSES)
    assert pool1.shape == (B1, C1, 1, 1)
    assert jnp.allclose(probs1, probs_ref1, atol=2e-3, rtol=2e-3)
    assert jnp.array_equal(pool1.reshape(B1, C1), pooled_ref1)
    assert jnp.array_equal(hm_out1, hm1)

    # NCHW compatibility wrapper parity.
    hm1_nchw = jnp.transpose(hm1, (0, 3, 1, 2))
    probs1b, hm_out1b, pool1b = globalnet_head_nchw(hm1_nchw, w1, b1)
    jax.block_until_ready(probs1b)
    assert jnp.allclose(probs1b, probs1, atol=1e-5, rtol=1e-5)
    assert pool1b.shape == (B1, C1, 1, 1)
    assert jnp.array_equal(hm_out1b, hm1_nchw)

    # ---- Case 2: bf16, ragged batch (B=20, TB=16 -> 2 grid steps, last tile partial) ----
    B2, C2 = 20, 256
    hm2 = jax.random.normal(k4, (B2, H, W, C2), jnp.float32).astype(jnp.bfloat16)
    w2 = jax.random.normal(k5, (NUM_CLASSES, C2), jnp.float32) * 0.05
    b2 = jax.random.normal(k6, (NUM_CLASSES,), jnp.float32) * 0.05

    probs2, hm_out2, pool2 = globalnet_head(hm2, w2, b2)
    jax.block_until_ready((probs2, hm_out2, pool2))

    probs_ref2, pooled_ref2 = _reference(hm2, w2, b2)
    assert probs2.shape == (B2, NUM_CLASSES)
    assert pool2.shape == (B2, C2, 1, 1)
    assert pool2.dtype == jnp.bfloat16
    assert jnp.allclose(probs2, probs_ref2, atol=2e-3, rtol=2e-3)
    assert jnp.array_equal(pool2.reshape(B2, C2), pooled_ref2)
    assert jnp.array_equal(hm_out2, hm2)

    print("KERNEL_OK")
</pallas_src>

<mosaic_0001>
module attributes {stable_mosaic.version = 11 : i64} {
  func.func @_head_kernel(%arg0: i32, %arg1: memref<4x49x128xf32, #tpu.memory_space<vmem>>, %arg2: memref<128x128xf32, #tpu.memory_space<vmem>>, %arg3: memref<1x128xf32, #tpu.memory_space<vmem>>, %arg4: memref<4x128xf32, #tpu.memory_space<vmem>>, %arg5: memref<4x128xf32, #tpu.memory_space<vmem>>) attributes {dimension_semantics = [#tpu.dimension_semantics<parallel>], iteration_bounds = array<i64: 1>, scalar_prefetch = 0 : i64, scratch_operands = 0 : i64, tpu.core_type = #tpu.core_type<tc>, window_params = [{transform_indices = @transform_0, window_bounds = array<i64: 4, 49, 128>}, {pipeline_mode = #tpu.pipeline_mode<synchronous>, transform_indices = @transform_1, window_bounds = array<i64: 128, 128>}, {pipeline_mode = #tpu.pipeline_mode<synchronous>, transform_indices = @transform_2, window_bounds = array<i64: 1, 128>}, {transform_indices = @transform_3, window_bounds = array<i64: 4, 128>}, {transform_indices = @transform_4, window_bounds = array<i64: 4, 128>}]} {
    %c0 = arith.constant 0 : index
    %c0_0 = arith.constant 0 : index
    %c0_1 = arith.constant 0 : index
    %0 = vector.load %arg1[%c0, %c0_0, %c0_1] : memref<4x49x128xf32, #tpu.memory_space<vmem>>, vector<4x49x128xf32>
    %cst = arith.constant dense<0xFF800000> : vector<4x128xf32>
    %1 = vector.multi_reduction <maximumf>, %0, %cst [1] : vector<4x49x128xf32> to vector<4x128xf32>
    %c0_2 = arith.constant 0 : index
    %c0_3 = arith.constant 0 : index
    %2 = vector.load %arg5[%c0_2, %c0_3] : memref<4x128xf32, #tpu.memory_space<vmem>>, vector<4x128xf32>
    tpu.vector_store %arg5[%c0_2, %c0_3], %1 {strides = array<i32>} : memref<4x128xf32, #tpu.memory_space<vmem>>, vector<4x128xf32>,
    %c0_4 = arith.constant 0 : index
    %c0_5 = arith.constant 0 : index
    %3 = vector.load %arg2[%c0_4, %c0_5] : memref<128x128xf32, #tpu.memory_space<vmem>>, vector<128x128xf32>
    %cst_6 = arith.constant dense<0.000000e+00> : vector<4x128xf32>
    %4 = tpu.matmul %1, %3, %cst_6 {dimension_numbers = #tpu.dot_dimension_numbers<[1], [0], [0], [1], [0, 0, 1, 1], [], []>} : vector<4x128xf32>, vector<128x128xf32>, vector<4x128xf32> -> vector<4x128xf32>
    %c0_7 = arith.constant 0 : index
    %c0_8 = arith.constant 0 : index
    %5 = vector.load %arg3[%c0_7, %c0_8] : memref<1x128xf32, #tpu.memory_space<vmem>>, vector<1x128xf32>
    %6 = vector.broadcast %5 : vector<1x128xf32> to vector<4x128xf32>
    %7 = arith.addf %4, %6 : vector<4x128xf32>
    %8 = arith.negf %7 : vector<4x128xf32>
    %9 = math.exp %8 : vector<4x128xf32>
    %cst_9 = arith.constant 1.000000e+00 : f32
    %10 = vector.broadcast %cst_9 : f32 to vector<4x128xf32>
    %11 = arith.addf %10, %9 : vector<4x128xf32>
    %12 = arith.divf %10, %11 : vector<4x128xf32>
    %c0_10 = arith.constant 0 : index
    %c0_11 = arith.constant 0 : index
    %13 = vector.load %arg4[%c0_10, %c0_11] : memref<4x128xf32, #tpu.memory_space<vmem>>, vector<4x128xf32>
    tpu.vector_store %arg4[%c0_10, %c0_11], %12 {strides = array<i32>} : memref<4x128xf32, #tpu.memory_space<vmem>>, vector<4x128xf32>,
    return
  }
  func.func @transform_0(%arg0: i32) -> (i32, i32, i32) {
    %c0_i32 = arith.constant 0 : i32
    %c0_i32_0 = arith.constant 0 : i32
    %c0_i32_1 = arith.constant 0 : i32
    return %arg0, %c0_i32, %c0_i32_0 : i32, i32, i32
  }
  func.func @transform_1(%arg0: i32) -> (i32, i32) {
    %c0_i32 = arith.constant 0 : i32
    %c0_i32_0 = arith.constant 0 : i32
    %c0_i32_1 = arith.constant 0 : i32
    return %c0_i32, %c0_i32_0 : i32, i32
  }
  func.func @transform_2(%arg0: i32) -> (i32, i32) {
    %c0_i32 = arith.constant 0 : i32
    %c0_i32_0 = arith.constant 0 : i32
    %c0_i32_1 = arith.constant 0 : i32
    return %c0_i32, %c0_i32_0 : i32, i32
  }
  func.func @transform_3(%arg0: i32) -> (i32, i32) {
    %c0_i32 = arith.constant 0 : i32
    %c0_i32_0 = arith.constant 0 : i32
    return %arg0, %c0_i32 : i32, i32
  }
  func.func @transform_4(%arg0: i32) -> (i32, i32) {
    %c0_i32 = arith.constant 0 : i32
    %c0_i32_0 = arith.constant 0 : i32
    return %arg0, %c0_i32 : i32, i32
  }
}

</mosaic_0001>

<llo_original>
// kernel: tpu_custom_call.1
$region0: #{tpu_custom_call.1}
  #allocation0 [shape = 'u32[]', space=smem, size = 0x4, offset = 0x4, fixed_abs, tag = 'smem constant byte address 0x4 - core index']
  #allocation1 [shape = 'u32[144,128]{1,0:T(1,128)}', space=vmem, size = 0x12000, scoped, tag = 'internal scratch']
  %s0 = inlined_call_operand.vmem [shape: f32[4,49,128], index: 0, kind: input, shape index: {}]
  %s1 = inlined_call_operand.vmem [shape: f32[128,128], index: 1, kind: input, shape index: {}]
  %s2 = inlined_call_operand.vmem [shape: f32[1,128], index: 2, kind: input, shape index: {}]
  %s3 = inlined_call_operand.hbm [shape: f32[4,128], index: 3, kind: output, shape index: {0}]
  %s4 = inlined_call_operand.hbm [shape: f32[4,128], index: 4, kind: output, shape index: {1}]
  %5 = xla_tuple %s3, %s4
  %s6 = sld [smem:[#allocation0]]
  $region30: #{tpu_custom_call.1} parent=0
    _
  %s8 = ssub.s32 1, %s6
  %s9 = scalar_select 0, %s8, %s6
  $region1: #{tpu_custom_call.1} parent=0
    #allocation2 [shape = 'u8[2048]{0}', space=vmem, size = 0x800, scoped, tag = 'output window, operand 0, single buffered']
    #allocation3 [shape = 's32[1]{0}', space=sflag, size = 0x4, scoped, tag = 'scoped memory for tpu_custom_call.1']
    #allocation4 [shape = 'u8[2048]{0}', space=vmem, size = 0x800, scoped, tag = 'output window, operand 1, single buffered']
    #allocation5 [shape = 's32[1]{0}', space=sflag, size = 0x4, scoped, tag = 'scoped memory for tpu_custom_call.1']
    %10 = vsyncpa [#allocation3], 0
    %11 = vsyncpa [#allocation5], 0
    // Predicated region
    $region2: #{tpu_custom_call.1} parent=1 // pred_check
      _
    $region3: #{tpu_custom_call.1} parent=1 // pred_check_branch
      %13 = sbr.rel (0) target = $region5
    $region4: #{tpu_custom_call.1} parent=1 // pred_region
      _
    $region5: #{tpu_custom_call.1} parent=1 // pred_fallthru
      _
    // Predicated region
    $region6: #{tpu_custom_call.1} parent=1 // pred_check
      _
    $region7: #{tpu_custom_call.1} parent=1 // pred_check_branch
      %15 = sbr.rel (0) target = $region9
    $region8: #{tpu_custom_call.1} parent=1 // pred_region
      _
    $region9: #{tpu_custom_call.1} parent=1 // pred_fallthru
      _
    // Predicated region
    $region10: #{tpu_custom_call.1} parent=1 // pred_check
      _
    $region11: #{tpu_custom_call.1} parent=1 // pred_check_branch
      %17 = sbr.rel (0) target = $region13
    $region12: #{tpu_custom_call.1} parent=1 // pred_region
      _
    $region13: #{tpu_custom_call.1} parent=1 // pred_fallthru
      _
    %v18 = vld [vmem:[%s0] sm:$0xff]
    %v19 = vld [vmem:[%s0 + $0x8] sm:$0xff]
    %v20 = vld [vmem:[%s0 + $0x10] sm:$0xff]
    %v21 = vld [vmem:[%s0 + $0x18] sm:$0xff]
    %v22 = vld [vmem:[%s0 + $0x20] sm:$0xff]
    %v23 = vld [vmem:[%s0 + $0x28] sm:$0xff]
    %v24 = vld [vmem:[%s0 + $0x30] sm:$0x1]
    %v25 = vld [vmem:[%s0 + $0x38] sm:$0xff]
    %v26 = vld [vmem:[%s0 + $0x40] sm:$0xff]
    %v27 = vld [vmem:[%s0 + $0x48] sm:$0xff]
    %v28 = vld [vmem:[%s0 + $0x50] sm:$0xff]
    %v29 = vld [vmem:[%s0 + $0x58] sm:$0xff]
    %v30 = vld [vmem:[%s0 + $0x60] sm:$0xff]
    %v31 = vld [vmem:[%s0 + $0x68] sm:$0x1]
    %v32 = vld [vmem:[%s0 + $0x70] sm:$0xff]
    %v33 = vld [vmem:[%s0 + $0x78] sm:$0xff]
    %v34 = vld [vmem:[%s0 + $0x80] sm:$0xff]
    %v35 = vld [vmem:[%s0 + $0x88] sm:$0xff]
    %v36 = vld [vmem:[%s0 + $0x90] sm:$0xff]
    %v37 = vld [vmem:[%s0 + $0x98] sm:$0xff]
    %v38 = vld [vmem:[%s0 + $0xa0] sm:$0x1]
    %v39 = vld [vmem:[%s0 + $0xa8] sm:$0xff]
    %v40 = vld [vmem:[%s0 + $0xb0] sm:$0xff]
    %v41 = vld [vmem:[%s0 + $0xb8] sm:$0xff]
    %v42 = vld [vmem:[%s0 + $0xc0] sm:$0xff]
    %v43 = vld [vmem:[%s0 + $0xc8] sm:$0xff]
    %v44 = vld [vmem:[%s0 + $0xd0] sm:$0xff]
    %v45 = vld [vmem:[%s0 + $0xd8] sm:$0x1]
    %v46 = vmax.f32 %v18, %v19
    %v47 = vmax.f32 %v46, %v20
    %v48 = vmax.f32 %v47, %v21
    %v49 = vmax.f32 %v48, %v22
    %v50 = vmax.f32 %v49, %v23
    %vm51 = vcmask 1040384
    %v52 = vsel %vm51, %v24, -inf
    %v53 = vmax.f32 %v50, %v52
    %v54 = vrot.slane %v53, 4
    %v55 = vmax.f32 %v53, %v54
    %v56 = vrot.slane %v55, 2
    %v57 = vmax.f32 %v55, %v56
    %v58 = vrot.slane %v57, 1
    %v59 = vmax.f32 %v57, %v58
    %v60 = vmax.f32 %v25, %v26
    %v61 = vmax.f32 %v60, %v27
    %v62 = vmax.f32 %v61, %v28
    %v63 = vmax.f32 %v62, %v29
    %v64 = vmax.f32 %v63, %v30
    %v65 = vsel %vm51, %v31, -inf
    %v66 = vmax.f32 %v64, %v65
    %v67 = vrot.slane %v66, 4
    %v68 = vmax.f32 %v66, %v67
    %v69 = vrot.slane %v68, 2
    %v70 = vmax.f32 %v68, %v69
    %v71 = vrot.slane %v70, 1
    %v72 = vmax.f32 %v70, %v71
    %v73 = vmax.f32 %v32, %v33
    %v74 = vmax.f32 %v73, %v34
    %v75 = vmax.f32 %v74, %v35
    %v76 = vmax.f32 %v75, %v36
    %v77 = vmax.f32 %v76, %v37
    %v78 = vsel %vm51, %v38, -inf
    %v79 = vmax.f32 %v77, %v78
    %v80 = vrot.slane %v79, 4
    %v81 = vmax.f32 %v79, %v80
    %v82 = vrot.slane %v81, 2
    %v83 = vmax.f32 %v81, %v82
    %v84 = vrot.slane %v83, 1
    %v85 = vmax.f32 %v83, %v84
    %v86 = vmax.f32 %v39, %v40
    %v87 = vmax.f32 %v86, %v41
    %v88 = vmax.f32 %v87, %v42
    %v89 = vmax.f32 %v88, %v43
    %v90 = vmax.f32 %v89, %v44
    %v91 = vsel %vm51, %v45, -inf
    %v92 = vmax.f32 %v90, %v91
    %v93 = vrot.slane %v92, 4
    %v94 = vmax.f32 %v92, %v93
    %v95 = vrot.slane %v94, 2
    %v96 = vmax.f32 %v94, %v95
    %v97 = vrot.slane %v96, 1
    %v98 = vmax.f32 %v96, %v97
    %vm103 = vcmask 1041409
    %v104 = vsel %vm103, %v72, %v59
    %vm105 = vcmask 1042434
    %v106 = vsel %vm105, %v85, %v104
    %vm107 = vcmask 1043459
    %v108 = vsel %vm107, %v98, %v106
    %110 = vst [vmem:[#allocation4] sm:$0xf] %v108
    %v111 = vld [vmem:[%s1] sm:$0xff]
    %v112 = vld [vmem:[%s1 + $0x8] sm:$0xff]
    %v113 = vld [vmem:[%s1 + $0x10] sm:$0xff]
    %v114 = vld [vmem:[%s1 + $0x18] sm:$0xff]
    %v115 = vld [vmem:[%s1 + $0x20] sm:$0xff]
    %v116 = vld [vmem:[%s1 + $0x28] sm:$0xff]
    %v117 = vld [vmem:[%s1 + $0x30] sm:$0xff]
    %v118 = vld [vmem:[%s1 + $0x38] sm:$0xff]
    %v119 = vld [vmem:[%s1 + $0x40] sm:$0xff]
    %v120 = vld [vmem:[%s1 + $0x48] sm:$0xff]
    %v121 = vld [vmem:[%s1 + $0x50] sm:$0xff]
    %v122 = vld [vmem:[%s1 + $0x58] sm:$0xff]
    %v123 = vld [vmem:[%s1 + $0x60] sm:$0xff]
    %v124 = vld [vmem:[%s1 + $0x68] sm:$0xff]
    %v125 = vld [vmem:[%s1 + $0x70] sm:$0xff]
    %v126 = vld [vmem:[%s1 + $0x78] sm:$0xff]
    %v127 = vld [vmem:[%s2] sm:$0x1]
    %v129 = vlaneseq
    %v130 = vshrl.u32 %v129, 7
    %v131 = vsub.s32 0, %v130
    %v132 = vrot.slane %v127, %v131
    %134 = vmatprep.subr.mxu0 0.0
    %135 = vmatpush1.msra.mxu0 %v111
    %136 = vmatprep.subr.mxu0 0.0
    %137 = vmatpush1.msra.mxu0 %v112
    %138 = vmatprep.subr.mxu0 0.0
    %139 = vmatpush1.msra.mxu0 %v113
    %140 = vmatprep.subr.mxu0 0.0
    %141 = vmatpush1.msra.mxu0 %v114
    %142 = vmatprep.subr.mxu0 0.0
    %143 = vmatpush1.msra.mxu0 %v115
    %144 = vmatprep.subr.mxu0 0.0
    %145 = vmatpush1.msra.mxu0 %v116
    %146 = vmatprep.subr.mxu0 0.0
    %147 = vmatpush1.msra.mxu0 %v117
    %148 = vmatprep.subr.mxu0 0.0
    %149 = vmatpush1.msra.mxu0 %v118
    %150 = vmatprep.subr.mxu0 0.0
    %151 = vmatpush1.msra.mxu0 %v119
    %152 = vmatprep.subr.mxu0 0.0
    %153 = vmatpush1.msra.mxu0 %v120
    %154 = vmatprep.subr.mxu0 0.0
    %155 = vmatpush1.msra.mxu0 %v121
    %156 = vmatprep.subr.mxu0 0.0
    %157 = vmatpush1.msra.mxu0 %v122
    %158 = vmatprep.subr.mxu0 0.0
    %159 = vmatpush1.msra.mxu0 %v123
    %160 = vmatprep.subr.mxu0 0.0
    %161 = vmatpush1.msra.mxu0 %v124
    %162 = vmatprep.subr.mxu0 0.0
    %163 = vmatpush1.msra.mxu0 %v125
    %164 = vmatprep.subr.mxu0 0.0
    %165 = vmatpush1.msra.mxu0 %v126
    %166 = vmatprep.subr.mxu0 0.0
    %167 = vmatpush1.msra.mxu0 0.0
    %168 = vmatprep.subr.mxu0 0.0
    %169 = vmatpush1.msra.mxu0 0.0
    %170 = vmatprep.subr.mxu0 0.0
    %171 = vmatpush1.msra.mxu0 0.0
    %172 = vmatprep.subr.mxu0 0.0
    %173 = vmatpush1.msra.mxu0 0.0
    %174 = vmatprep.subr.mxu0 0.0
    %175 = vmatpush1.msra.mxu0 0.0
    %176 = vmatprep.subr.mxu0 0.0
    %177 = vmatpush1.msra.mxu0 0.0
    %178 = vmatprep.subr.mxu0 0.0
    %179 = vmatpush1.msra.mxu0 0.0
    %180 = vmatprep.subr.mxu0 0.0
    %181 = vmatpush1.msra.mxu0 0.0
    %182 = vmatprep.subr.mxu0 0.0
    %183 = vmatpush1.msra.mxu0 0.0
    %184 = vmatprep.subr.mxu0 0.0
    %185 = vmatpush1.msra.mxu0 0.0
    %186 = vmatprep.subr.mxu0 0.0
    %187 = vmatpush1.msra.mxu0 0.0
    %188 = vmatprep.subr.mxu0 0.0
    %189 = vmatpush1.msra.mxu0 0.0
    %190 = vmatprep.subr.mxu0 0.0
    %191 = vmatpush1.msra.mxu0 0.0
    %192 = vmatprep.subr.mxu0 0.0
    %193 = vmatpush1.msra.mxu0 0.0
    %194 = vmatprep.subr.mxu0 0.0
    %195 = vmatpush1.msra.mxu0 0.0
    %196 = vmatprep.subr.mxu0 0.0
    %197 = vmatpush1.msra.mxu0 0.0
    %198 = vmatprep.mubr.f32.mxu0 0.0
    %199 = vmatmul.mubr.f32.gmra.mrb[0].mxu0 %v108
    %v200 = vpop.f32.mrb[0].mxu0
    %v201 = vadd.f32 %v132, %v200
    %v202 = vpop.f32.mrb[0].mxu0
    %203 = vdwg.mxu0
    %v204 = vxor.u32 %v201, 2147483648
    %v205 = vmul.f32 %v204, 1.442695
    %v206 = vpow.pop %v205
    %v207 = vadd.f32 %v206, 1.0
    %v208 = vrcp.pop %v207
    %v209 = vmul.f32 1.0, %v208
    %210 = vst [vmem:[#allocation2] sm:$0xf] %v209
    // Predicated region
    $region14: #{tpu_custom_call.1} parent=1 // pred_check
      _
    $region15: #{tpu_custom_call.1} parent=1 // pred_check_branch
      %212 = sbr.rel (0) target = $region17
    $region16: #{tpu_custom_call.1} parent=1 // pred_region
      %s214 = ssub.s32 64, 64
      %215 = vsyncadd [#allocation3], %s214
      %s217 = sshll.u32 [#allocation2], 4
      %s218 = int_to_ptr.vmem [resolvable:$true] %s217
      %220 = dma.vmem_to_hbm [thread:$0]  %s218, 64, %s3, [#allocation3]
    $region17: #{tpu_custom_call.1} parent=1 // pred_fallthru
      _
    // Predicated region
    $region18: #{tpu_custom_call.1} parent=1 // pred_check
      _
    $region19: #{tpu_custom_call.1} parent=1 // pred_check_branch
      %222 = sbr.rel (0) target = $region21
    $region20: #{tpu_custom_call.1} parent=1 // pred_region
      %s224 = ssub.s32 64, 64
      %225 = vsyncadd [#allocation5], %s224
      %s227 = sshll.u32 [#allocation4], 4
      %s228 = int_to_ptr.vmem [resolvable:$true] %s227
      %230 = dma.vmem_to_hbm [thread:$0]  %s228, 64, %s4, [#allocation5]
    $region21: #{tpu_custom_call.1} parent=1 // pred_fallthru
      _
    // Predicated region
    $region22: #{tpu_custom_call.1} parent=1 // pred_check
      _
    $region23: #{tpu_custom_call.1} parent=1 // pred_check_branch
      %232 = sbr.rel (0) target = $region25
    $region24: #{tpu_custom_call.1} parent=1 // pred_region
      %233 = dma.done [#allocation3], 64
    $region25: #{tpu_custom_call.1} parent=1 // pred_fallthru
      _
    // Predicated region
    $region26: #{tpu_custom_call.1} parent=1 // pred_check
      _
    $region27: #{tpu_custom_call.1} parent=1 // pred_check_branch
      %235 = sbr.rel (0) target = $region29
    $region28: #{tpu_custom_call.1} parent=1 // pred_region
      %236 = dma.done [#allocation5], 64
    $region29: #{tpu_custom_call.1} parent=1 // pred_fallthru
      _
    %237 = vsyncpa [#allocation3], 1
    %238 = vsyncpa [#allocation5], 1

</llo_original>
